<compile_context>
chip_gen: v5e
topology: v5e:2x2
jax: 0.10.0
libtpu: 0.0.40
codegen_flags: <defaults>
</compile_context>

<pallas_src>
import functools
from typing import NamedTuple, Tuple

import jax
import jax.numpy as jnp
from jax.experimental import pallas as pl
from jax.experimental.pallas import tpu as pltpu

_LANE = 128      # lane width of a vreg (last-dim alignment target)
_SUBLANE = 8     # sublane count (second-to-last-dim alignment target)


def _round_up(x: int, m: int) -> int:
    return ((x + m - 1) // m) * m


def _cdiv(a: int, b: int) -> int:
    return (a + b - 1) // b


def _apply_activation(h, activation: str):
    if activation == "relu":
        return jnp.maximum(h, 0.0)
    elif activation == "gelu":
        # nn.GELU() default is the exact (erf-based) GELU.
        return jax.nn.gelu(h, approximate=False)
    else:
        raise ValueError(f"Activation function {activation} not implemented!")


def _vmem_capacity_bytes() -> int:
    """Physical VMEM per TensorCore; conservative fallback if query fails."""
    try:
        cap = int(pltpu.get_tpu_info().vmem_capacity_bytes)
        if cap > 0:
            return cap
    except Exception:
        pass
    return 64 << 20   # v7x per-TC size (most restrictive generation)


# --------------------------------------------------------------------------
# Parameter preparation (hoisted out of the per-call forward path)
# --------------------------------------------------------------------------
class PreparedMLP(NamedTuple):
    dims: Tuple[int, ...]       # true feature dims [d0, d1, ..., dn]
    dims_p: Tuple[int, ...]     # lane-padded feature dims
    weights: Tuple[jax.Array, ...]   # (din_p, dout_p) compute_dtype, (in,out) layout
    biases: Tuple[jax.Array, ...]    # (1, dout_p) float32
    compute_dtype: jnp.dtype


def prepare_mlp_params(weights, biases, compute_dtype=jnp.bfloat16) -> PreparedMLP:
    """Transpose to (in, out), zero-pad feature dims to 128 lanes, cast to bf16.

    Call ONCE and reuse the result across forward calls — this removes the
    per-call transpose/pad/cast HBM traffic flagged in the perf review.
    """
    num_layers = len(weights)
    dims = [int(weights[0].shape[1])] + [int(w.shape[0]) for w in weights]
    dims_p = [_round_up(d, _LANE) for d in dims]

    w_list, b_list = [], []
    for li in range(num_layers):
        w, b = weights[li], biases[li]
        din, dout = dims[li], dims[li + 1]
        din_p, dout_p = dims_p[li], dims_p[li + 1]
        w_t = jnp.zeros((din_p, dout_p), compute_dtype)
        w_t = w_t.at[:din, :dout].set(jnp.transpose(w).astype(compute_dtype))
        b_p = jnp.zeros((1, dout_p), jnp.float32)
        b_p = b_p.at[0, :dout].set(b.astype(jnp.float32))
        w_list.append(w_t)
        b_list.append(b_p)
    return PreparedMLP(tuple(dims), tuple(dims_p), tuple(w_list), tuple(b_list),
                       jnp.dtype(compute_dtype))


# --------------------------------------------------------------------------
# Fused, weight-resident kernel (default path)
# --------------------------------------------------------------------------
def _mlp_fused_kernel(*refs, num_layers: int, activation: str):
    # refs = (x_ref, w1_ref, b1_ref, w2_ref, b2_ref, ..., out_ref)
    x_ref = refs[0]
    out_ref = refs[-1]
    param_refs = refs[1:-1]

    h = x_ref[...]                                       # bf16 (TB, d0_p)
    for layer in range(num_layers):
        w = param_refs[2 * layer][...]                   # bf16 (d_in_p, d_out_p)
        b = param_refs[2 * layer + 1][...]               # f32  (1, d_out_p)
        acc = jnp.dot(h, w, preferred_element_type=jnp.float32)   # MXU, f32 acc
        acc = acc + b                                    # bias add in f32
        if layer != num_layers - 1:                      # last Linear has no activation
            acc = _apply_activation(acc, activation)
            h = acc.astype(w.dtype)                      # bf16 for the next matmul
        else:
            out_ref[...] = acc.astype(out_ref.dtype)


# --------------------------------------------------------------------------
# Layer-wise tiled fallback (weights too big to stay resident in VMEM)
# --------------------------------------------------------------------------
def _linear_layer_kernel(x_ref, w_ref, b_ref, o_ref, acc_ref, *,
                         apply_act: bool, activation: str):
    @pl.when(pl.program_id(2) == 0)
    def _():
        acc_ref[...] = jnp.zeros_like(acc_ref)

    acc_ref[...] += jnp.dot(x_ref[...], w_ref[...],
                            preferred_element_type=jnp.float32)

    @pl.when(pl.program_id(2) == pl.num_programs(2) - 1)
    def _():
        acc = acc_ref[...] + b_ref[...]
        if apply_act:
            acc = _apply_activation(acc, activation)
        o_ref[...] = acc.astype(o_ref.dtype)


def _linear_layer(h, w_t, b_p, *, apply_act, activation, out_dtype, tm):
    M, K = h.shape
    _, N = w_t.shape
    tm = min(tm, M)
    tn = 256 if N % 256 == 0 and N >= 256 else 128
    tn = min(tn, N)
    tk = 512 if K % 512 == 0 and K >= 512 else (256 if K % 256 == 0 and K >= 256 else 128)
    tk = min(tk, K)
    grid = (M // tm, N // tn, K // tk)

    kernel = functools.partial(_linear_layer_kernel,
                               apply_act=apply_act, activation=activation)
    return pl.pallas_call(
        kernel,
        out_shape=jax.ShapeDtypeStruct((M, N), out_dtype),
        grid=grid,
        in_specs=[pl.BlockSpec((tm, tk), lambda i, j, k: (i, k)),
                  pl.BlockSpec((tk, tn), lambda i, j, k: (k, j)),
                  pl.BlockSpec((1, tn), lambda i, j, k: (0, j))],
        out_specs=pl.BlockSpec((tm, tn), lambda i, j, k: (i, j)),
        scratch_shapes=[pltpu.VMEM((tm, tn), jnp.float32)],
        compiler_params=pltpu.CompilerParams(
            dimension_semantics=("parallel", "parallel", "arbitrary")),
    )(h, w_t, b_p)


# --------------------------------------------------------------------------
# Forward
# --------------------------------------------------------------------------
def mlp_forward(x, params: PreparedMLP, activation: str = "relu", *,
                batch_tile: int = 512):
    """Fused MLP forward. `params` must come from prepare_mlp_params()."""
    dims, dims_p = params.dims, params.dims_p
    num_layers = len(params.weights)
    compute_dtype = params.compute_dtype
    cd_itemsize = jnp.dtype(compute_dtype).itemsize
    out_itemsize = jnp.dtype(x.dtype).itemsize

    batch, d_in = x.shape
    assert d_in == dims[0], f"input feature dim {d_in} != {dims[0]}"

    # ---- batch tile: balanced tiles to minimize padding; >=2 grid steps when
    # ---- the batch allows it so the v7x megacore has work for both TCs.
    n_tiles = max(_cdiv(batch, batch_tile), min(2, _cdiv(batch, _SUBLANE)))
    tb = _round_up(_cdiv(batch, n_tiles), _SUBLANE)

    # ---- VMEM budget (weights single-buffered & resident; x/out double-buffered)
    weight_bytes = sum(dims_p[i] * dims_p[i + 1] for i in range(num_layers)) * cd_itemsize
    bias_bytes = sum(dims_p[1:]) * 4

    def fused_vmem_est(tile_b):
        io = 2 * tile_b * (dims_p[0] * cd_itemsize + dims_p[-1] * out_itemsize)
        interm = 3 * tile_b * max(dims_p) * 4
        return weight_bytes + bias_bytes + io + interm

    cap = _vmem_capacity_bytes()
    ceiling = min(int(cap * 0.82), cap - (10 << 20))   # leave compiler headroom

    # Shrink the batch tile if needed before giving up on the resident design.
    while fused_vmem_est(tb) > ceiling and tb > 4 * _SUBLANE:
        tb = _round_up(tb // 2, _SUBLANE)

    batch_p = _round_up(batch, tb)
    grid = (batch_p // tb,)
    use_fused = fused_vmem_est(tb) <= ceiling

    # ---- pad + cast the streaming input (weights were prepared once, outside)
    x_p = jnp.zeros((batch_p, dims_p[0]), compute_dtype)
    x_p = x_p.at[:batch, :d_in].set(x.astype(compute_dtype))

    if not use_fused:
        # Weights do not fit resident even single-buffered: per-layer tiled path.
        h = x_p
        for li in range(num_layers):
            last = (li == num_layers - 1)
            h = _linear_layer(h, params.weights[li], params.biases[li],
                              apply_act=not last, activation=activation,
                              out_dtype=(x.dtype if last else compute_dtype),
                              tm=tb)
        return h[:batch, :dims[-1]]

    # ---- fused path -----------------------------------------------------------
    kernel_args = [x_p]
    for w_t, b_p in zip(params.weights, params.biases):
        kernel_args.append(w_t)
        kernel_args.append(b_p)

    flops = 2 * batch_p * sum(dims_p[i] * dims_p[i + 1] for i in range(num_layers))
    transcendentals = (batch_p * sum(dims_p[1:-1])) if activation == "gelu" else 0
    bytes_accessed = (weight_bytes + bias_bytes
                      + batch_p * dims_p[0] * cd_itemsize
                      + batch_p * dims_p[-1] * out_itemsize)
    cost = pl.CostEstimate(flops=int(flops), transcendentals=int(transcendentals),
                           bytes_accessed=int(bytes_accessed))

    def build_call(single_buffer: bool):
        # streamed x tile (double-buffered by default)
        in_specs = [pl.BlockSpec((tb, dims_p[0]), lambda i: (i, 0))]
        res_kwargs = {"pipeline_mode": pl.Buffered(1)} if single_buffer else {}
        for li in range(num_layers):
            din_p, dout_p = dims_p[li], dims_p[li + 1]
            # constant index_map -> DMA'd once, resident across all grid steps
            in_specs.append(pl.BlockSpec((din_p, dout_p), lambda i: (0, 0), **res_kwargs))
            in_specs.append(pl.BlockSpec((1, dout_p), lambda i: (0, 0), **res_kwargs))
        out_spec = pl.BlockSpec((tb, dims_p[-1]), lambda i: (i, 0))

        est = fused_vmem_est(tb)
        if not single_buffer:
            est += weight_bytes + bias_bytes
        vmem_limit = max(32 << 20, int(1.25 * est) + (4 << 20))
        vmem_limit = int(min(vmem_limit, ceiling))

        kernel = functools.partial(_mlp_fused_kernel,
                                   num_layers=num_layers, activation=activation)
        return pl.pallas_call(
            kernel,
            out_shape=jax.ShapeDtypeStruct((batch_p, dims_p[-1]), x.dtype),
            grid=grid,
            in_specs=in_specs,
            out_specs=out_spec,
            compiler_params=pltpu.CompilerParams(
                dimension_semantics=("parallel",),
                vmem_limit_bytes=vmem_limit),
            cost_estimate=cost,
        )

    try:
        out_p = build_call(single_buffer=True)(*kernel_args)
    except Exception:
        # Defensive: fall back to default (double-buffered) resident blocks.
        out_p = build_call(single_buffer=False)(*kernel_args)

    # strip batch / feature padding
    return out_p[:batch, :dims[-1]]


def mlp_forward_raw(x, weights, biases, activation: str = "relu", *,
                    compute_dtype=jnp.bfloat16, batch_tile: int = 512):
    """Convenience wrapper: prepares params in-line (prefer prepare once + reuse)."""
    params = prepare_mlp_params(weights, biases, compute_dtype)
    return mlp_forward(x, params, activation, batch_tile=batch_tile)


# --------------------------------------------------------------------------
# Test harness
# --------------------------------------------------------------------------
def init_mlp_params(key, dimensions):
    """Deterministic synthetic init matching nn.Linear shapes: W (out, in), b (out,)."""
    weights, biases = [], []
    last_dim = dimensions[0]
    for dim in dimensions[1:]:
        key, kw, kb = jax.random.split(key, 3)
        bound = 1.0 / (last_dim ** 0.5)
        w = jax.random.uniform(kw, (dim, last_dim), jnp.float32, -bound, bound)
        b = jax.random.uniform(kb, (dim,), jnp.float32, -bound, bound)
        weights.append(w)
        biases.append(b)
        last_dim = dim
    return weights, biases


def mlp_reference(x, weights, biases, activation: str = "relu"):
    """Plain-JAX f32 reference mirroring the PyTorch forward."""
    h = x
    for i, (w, b) in enumerate(zip(weights, biases)):
        h = h @ w.T + b
        if i != len(weights) - 1:
            h = _apply_activation(h, activation)
    return h


if __name__ == "__main__":
    key = jax.random.PRNGKey(0)
    activation = "relu"
    dimensions = [4, 32, 32, 4]   # MLP(dimensions=[4, 32, 32, 4])
    batch = 8

    key, kx, kp = jax.random.split(key, 3)
    x = jax.random.normal(kx, (batch, dimensions[0]), jnp.float32)
    weights, biases = init_mlp_params(kp, dimensions)

    # Prepare (transpose + pad + cast) ONCE, reuse across forward calls.
    params = prepare_mlp_params(weights, biases)

    y = mlp_forward(x, params, activation)
    y = jax.block_until_ready(y)

    y_ref = mlp_reference(x, weights, biases, activation)
    assert y.shape == (batch, dimensions[-1])
    # bf16 MXU operands with f32 accumulation -> ~1e-2 level tolerance vs f32 reference
    assert jnp.allclose(y, y_ref, atol=3e-2, rtol=3e-2), "mismatch vs reference"

    print("KERNEL_OK")
</pallas_src>

<mosaic_0001>
module attributes {stable_mosaic.version = 11 : i64} {
  func.func @_mlp_fused_kernel(%arg0: i32, %arg1: memref<8x128xbf16, #tpu.memory_space<vmem>>, %arg2: memref<128x128xbf16, #tpu.memory_space<vmem>>, %arg3: memref<1x128xf32, #tpu.memory_space<vmem>>, %arg4: memref<128x128xbf16, #tpu.memory_space<vmem>>, %arg5: memref<1x128xf32, #tpu.memory_space<vmem>>, %arg6: memref<128x128xbf16, #tpu.memory_space<vmem>>, %arg7: memref<1x128xf32, #tpu.memory_space<vmem>>, %arg8: memref<8x128xf32, #tpu.memory_space<vmem>>) attributes {dimension_semantics = [#tpu.dimension_semantics<parallel>], iteration_bounds = array<i64: 1>, scalar_prefetch = 0 : i64, scratch_operands = 0 : i64, tpu.core_type = #tpu.core_type<tc>, window_params = [{transform_indices = @transform_0, window_bounds = array<i64: 8, 128>}, {pipeline_mode = #tpu.pipeline_mode<synchronous>, transform_indices = @transform_1, window_bounds = array<i64: 128, 128>}, {pipeline_mode = #tpu.pipeline_mode<synchronous>, transform_indices = @transform_2, window_bounds = array<i64: 1, 128>}, {pipeline_mode = #tpu.pipeline_mode<synchronous>, transform_indices = @transform_3, window_bounds = array<i64: 128, 128>}, {pipeline_mode = #tpu.pipeline_mode<synchronous>, transform_indices = @transform_4, window_bounds = array<i64: 1, 128>}, {pipeline_mode = #tpu.pipeline_mode<synchronous>, transform_indices = @transform_5, window_bounds = array<i64: 128, 128>}, {pipeline_mode = #tpu.pipeline_mode<synchronous>, transform_indices = @transform_6, window_bounds = array<i64: 1, 128>}, {transform_indices = @transform_7, window_bounds = array<i64: 8, 128>}]} {
    %c0 = arith.constant 0 : index
    %c0_0 = arith.constant 0 : index
    %0 = vector.load %arg1[%c0, %c0_0] : memref<8x128xbf16, #tpu.memory_space<vmem>>, vector<8x128xbf16>
    %c0_1 = arith.constant 0 : index
    %c0_2 = arith.constant 0 : index
    %1 = vector.load %arg2[%c0_1, %c0_2] : memref<128x128xbf16, #tpu.memory_space<vmem>>, vector<128x128xbf16>
    %c0_3 = arith.constant 0 : index
    %c0_4 = arith.constant 0 : index
    %2 = vector.load %arg3[%c0_3, %c0_4] : memref<1x128xf32, #tpu.memory_space<vmem>>, vector<1x128xf32>
    %cst = arith.constant dense<0.000000e+00> : vector<8x128xf32>
    %3 = tpu.matmul %0, %1, %cst {dimension_numbers = #tpu.dot_dimension_numbers<[1], [0], [0], [1], [0, 0, 1, 1], [], []>} : vector<8x128xbf16>, vector<128x128xbf16>, vector<8x128xf32> -> vector<8x128xf32>
    %4 = vector.broadcast %2 : vector<1x128xf32> to vector<8x128xf32>
    %5 = arith.addf %3, %4 : vector<8x128xf32>
    %cst_5 = arith.constant 0.000000e+00 : f32
    %6 = vector.broadcast %cst_5 : f32 to vector<8x128xf32>
    %7 = arith.maximumf %5, %6 : vector<8x128xf32>
    %8 = arith.truncf %7 : vector<8x128xf32> to vector<8x128xbf16>
    %c0_6 = arith.constant 0 : index
    %c0_7 = arith.constant 0 : index
    %9 = vector.load %arg4[%c0_6, %c0_7] : memref<128x128xbf16, #tpu.memory_space<vmem>>, vector<128x128xbf16>
    %c0_8 = arith.constant 0 : index
    %c0_9 = arith.constant 0 : index
    %10 = vector.load %arg5[%c0_8, %c0_9] : memref<1x128xf32, #tpu.memory_space<vmem>>, vector<1x128xf32>
    %cst_10 = arith.constant dense<0.000000e+00> : vector<8x128xf32>
    %11 = tpu.matmul %8, %9, %cst_10 {dimension_numbers = #tpu.dot_dimension_numbers<[1], [0], [0], [1], [0, 0, 1, 1], [], []>} : vector<8x128xbf16>, vector<128x128xbf16>, vector<8x128xf32> -> vector<8x128xf32>
    %12 = vector.broadcast %10 : vector<1x128xf32> to vector<8x128xf32>
    %13 = arith.addf %11, %12 : vector<8x128xf32>
    %cst_11 = arith.constant 0.000000e+00 : f32
    %14 = vector.broadcast %cst_11 : f32 to vector<8x128xf32>
    %15 = arith.maximumf %13, %14 : vector<8x128xf32>
    %16 = arith.truncf %15 : vector<8x128xf32> to vector<8x128xbf16>
    %c0_12 = arith.constant 0 : index
    %c0_13 = arith.constant 0 : index
    %17 = vector.load %arg6[%c0_12, %c0_13] : memref<128x128xbf16, #tpu.memory_space<vmem>>, vector<128x128xbf16>
    %c0_14 = arith.constant 0 : index
    %c0_15 = arith.constant 0 : index
    %18 = vector.load %arg7[%c0_14, %c0_15] : memref<1x128xf32, #tpu.memory_space<vmem>>, vector<1x128xf32>
    %cst_16 = arith.constant dense<0.000000e+00> : vector<8x128xf32>
    %19 = tpu.matmul %16, %17, %cst_16 {dimension_numbers = #tpu.dot_dimension_numbers<[1], [0], [0], [1], [0, 0, 1, 1], [], []>} : vector<8x128xbf16>, vector<128x128xbf16>, vector<8x128xf32> -> vector<8x128xf32>
    %20 = vector.broadcast %18 : vector<1x128xf32> to vector<8x128xf32>
    %21 = arith.addf %19, %20 : vector<8x128xf32>
    %c0_17 = arith.constant 0 : index
    %c0_18 = arith.constant 0 : index
    %22 = vector.load %arg8[%c0_17, %c0_18] : memref<8x128xf32, #tpu.memory_space<vmem>>, vector<8x128xf32>
    tpu.vector_store %arg8[%c0_17, %c0_18], %21 {strides = array<i32>} : memref<8x128xf32, #tpu.memory_space<vmem>>, vector<8x128xf32>,
    return
  }
  func.func @transform_0(%arg0: i32) -> (i32, i32) {
    %c0_i32 = arith.constant 0 : i32
    %c0_i32_0 = arith.constant 0 : i32
    return %arg0, %c0_i32 : i32, i32
  }
  func.func @transform_1(%arg0: i32) -> (i32, i32) {
    %c0_i32 = arith.constant 0 : i32
    %c0_i32_0 = arith.constant 0 : i32
    %c0_i32_1 = arith.constant 0 : i32
    return %c0_i32, %c0_i32_0 : i32, i32
  }
  func.func @transform_2(%arg0: i32) -> (i32, i32) {
    %c0_i32 = arith.constant 0 : i32
    %c0_i32_0 = arith.constant 0 : i32
    %c0_i32_1 = arith.constant 0 : i32
    return %c0_i32, %c0_i32_0 : i32, i32
  }
  func.func @transform_3(%arg0: i32) -> (i32, i32) {
    %c0_i32 = arith.constant 0 : i32
    %c0_i32_0 = arith.constant 0 : i32
    %c0_i32_1 = arith.constant 0 : i32
    return %c0_i32, %c0_i32_0 : i32, i32
  }
  func.func @transform_4(%arg0: i32) -> (i32, i32) {
    %c0_i32 = arith.constant 0 : i32
    %c0_i32_0 = arith.constant 0 : i32
    %c0_i32_1 = arith.constant 0 : i32
    return %c0_i32, %c0_i32_0 : i32, i32
  }
  func.func @transform_5(%arg0: i32) -> (i32, i32) {
    %c0_i32 = arith.constant 0 : i32
    %c0_i32_0 = arith.constant 0 : i32
    %c0_i32_1 = arith.constant 0 : i32
    return %c0_i32, %c0_i32_0 : i32, i32
  }
  func.func @transform_6(%arg0: i32) -> (i32, i32) {
    %c0_i32 = arith.constant 0 : i32
    %c0_i32_0 = arith.constant 0 : i32
    %c0_i32_1 = arith.constant 0 : i32
    return %c0_i32, %c0_i32_0 : i32, i32
  }
  func.func @transform_7(%arg0: i32) -> (i32, i32) {
    %c0_i32 = arith.constant 0 : i32
    %c0_i32_0 = arith.constant 0 : i32
    return %arg0, %c0_i32 : i32, i32
  }
}

module attributes {stable_mosaic.version = 11 : i64} {
  func.func @_mlp_fused_kernel(%arg0: i32, %arg1: memref<8x128xbf16, #tpu.memory_space<vmem>>, %arg2: memref<128x128xbf16, #tpu.memory_space<vmem>>, %arg3: memref<1x128xf32, #tpu.memory_space<vmem>>, %arg4: memref<128x128xbf16, #tpu.memory_space<vmem>>, %arg5: memref<1x128xf32, #tpu.memory_space<vmem>>, %arg6: memref<128x128xbf16, #tpu.memory_space<vmem>>, %arg7: memref<1x128xf32, #tpu.memory_space<vmem>>, %arg8: memref<8x128xf32, #tpu.memory_space<vmem>>) attributes {dimension_semantics = [#tpu.dimension_semantics<parallel>], iteration_bounds = array<i64: 1>, scalar_prefetch = 0 : i64, scratch_operands = 0 : i64, tpu.core_type = #tpu.core_type<tc>, window_params = [{transform_indices = @transform_0, window_bounds = array<i64: 8, 128>}, {pipeline_mode = #tpu.pipeline_mode<synchronous>, transform_indices = @transform_1, window_bounds = array<i64: 128, 128>}, {pipeline_mode = #tpu.pipeline_mode<synchronous>, transform_indices = @transform_2, window_bounds = array<i64: 1, 128>}, {pipeline_mode = #tpu.pipeline_mode<synchronous>, transform_indices = @transform_3, window_bounds = array<i64: 128, 128>}, {pipeline_mode = #tpu.pipeline_mode<synchronous>, transform_indices = @transform_4, window_bounds = array<i64: 1, 128>}, {pipeline_mode = #tpu.pipeline_mode<synchronous>, transform_indices = @transform_5, window_bounds = array<i64: 128, 128>}, {pipeline_mode = #tpu.pipeline_mode<synchronous>, transform_indices = @transform_6, window_bounds = array<i64: 1, 128>}, {transform_indices = @transform_7, window_bounds = array<i64: 8, 128>}]} {
    %c0 = arith.constant 0 : index
    %c0_0 = arith.constant 0 : index
    %0 = vector.load %arg1[%c0, %c0_0] : memref<8x128xbf16, #tpu.memory_space<vmem>>, vector<8x128xbf16>
    %c0_1 = arith.constant 0 : index
    %c0_2 = arith.constant 0 : index
    %1 = vector.load %arg2[%c0_1, %c0_2] : memref<128x128xbf16, #tpu.memory_space<vmem>>, vector<128x128xbf16>
    %c0_3 = arith.constant 0 : index
    %c0_4 = arith.constant 0 : index
    %2 = vector.load %arg3[%c0_3, %c0_4] : memref<1x128xf32, #tpu.memory_space<vmem>>, vector<1x128xf32>
    %cst = arith.constant dense<0.000000e+00> : vector<8x128xf32>
    %3 = tpu.matmul %0, %1, %cst {dimension_numbers = #tpu.dot_dimension_numbers<[1], [0], [0], [1], [0, 0, 1, 1], [], []>} : vector<8x128xbf16>, vector<128x128xbf16>, vector<8x128xf32> -> vector<8x128xf32>
    %4 = vector.broadcast %2 : vector<1x128xf32> to vector<8x128xf32>
    %5 = arith.addf %3, %4 : vector<8x128xf32>
    %cst_5 = arith.constant 0.000000e+00 : f32
    %6 = vector.broadcast %cst_5 : f32 to vector<8x128xf32>
    %7 = arith.maximumf %5, %6 : vector<8x128xf32>
    %8 = arith.truncf %7 : vector<8x128xf32> to vector<8x128xbf16>
    %c0_6 = arith.constant 0 : index
    %c0_7 = arith.constant 0 : index
    %9 = vector.load %arg4[%c0_6, %c0_7] : memref<128x128xbf16, #tpu.memory_space<vmem>>, vector<128x128xbf16>
    %c0_8 = arith.constant 0 : index
    %c0_9 = arith.constant 0 : index
    %10 = vector.load %arg5[%c0_8, %c0_9] : memref<1x128xf32, #tpu.memory_space<vmem>>, vector<1x128xf32>
    %cst_10 = arith.constant dense<0.000000e+00> : vector<8x128xf32>
    %11 = tpu.matmul %8, %9, %cst_10 {dimension_numbers = #tpu.dot_dimension_numbers<[1], [0], [0], [1], [0, 0, 1, 1], [], []>} : vector<8x128xbf16>, vector<128x128xbf16>, vector<8x128xf32> -> vector<8x128xf32>
    %12 = vector.broadcast %10 : vector<1x128xf32> to vector<8x128xf32>
    %13 = arith.addf %11, %12 : vector<8x128xf32>
    %cst_11 = arith.constant 0.000000e+00 : f32
    %14 = vector.broadcast %cst_11 : f32 to vector<8x128xf32>
    %15 = arith.maximumf %13, %14 : vector<8x128xf32>
    %16 = arith.truncf %15 : vector<8x128xf32> to vector<8x128xbf16>
    %c0_12 = arith.constant 0 : index
    %c0_13 = arith.constant 0 : index
    %17 = vector.load %arg6[%c0_12, %c0_13] : memref<128x128xbf16, #tpu.memory_space<vmem>>, vector<128x128xbf16>
    %c0_14 = arith.constant 0 : index
    %c0_15 = arith.constant 0 : index
    %18 = vector.load %arg7[%c0_14, %c0_15] : memref<1x128xf32, #tpu.memory_space<vmem>>, vector<1x128xf32>
    %cst_16 = arith.constant dense<0.000000e+00> : vector<8x128xf32>
    %19 = tpu.matmul %16, %17, %cst_16 {dimension_numbers = #tpu.dot_dimension_numbers<[1], [0], [0], [1], [0, 0, 1, 1], [], []>} : vector<8x128xbf16>, vector<128x128xbf16>, vector<8x128xf32> -> vector<8x128xf32>
    %20 = vector.broadcast %18 : vector<1x128xf32> to vector<8x128xf32>
    %21 = arith.addf %19, %20 : vector<8x128xf32>
    %c0_17 = arith.constant 0 : index
    %c0_18 = arith.constant 0 : index
    %22 = vector.load %arg8[%c0_17, %c0_18] : memref<8x128xf32, #tpu.memory_space<vmem>>, vector<8x128xf32>
    tpu.vector_store %arg8[%c0_17, %c0_18], %21 {strides = array<i32>} : memref<8x128xf32, #tpu.memory_space<vmem>>, vector<8x128xf32>,
    return
  }
  func.func @transform_0(%arg0: i32) -> (i32, i32) {
    %c0_i32 = arith.constant 0 : i32
    %c0_i32_0 = arith.constant 0 : i32
    return %arg0, %c0_i32 : i32, i32
  }
  func.func @transform_1(%arg0: i32) -> (i32, i32) {
    %c0_i32 = arith.constant 0 : i32
    %c0_i32_0 = arith.constant 0 : i32
    %c0_i32_1 = arith.constant 0 : i32
    return %c0_i32, %c0_i32_0 : i32, i32
  }
  func.func @transform_2(%arg0: i32) -> (i32, i32) {
    %c0_i32 = arith.constant 0 : i32
    %c0_i32_0 = arith.constant 0 : i32
    %c0_i32_1 = arith.constant 0 : i32
    return %c0_i32, %c0_i32_0 : i32, i32
  }
  func.func @transform_3(%arg0: i32) -> (i32, i32) {
    %c0_i32 = arith.constant 0 : i32
    %c0_i32_0 = arith.constant 0 : i32
    %c0_i32_1 = arith.constant 0 : i32
    return %c0_i32, %c0_i32_0 : i32, i32
  }
  func.func @transform_4(%arg0: i32) -> (i32, i32) {
    %c0_i32 = arith.constant 0 : i32
    %c0_i32_0 = arith.constant 0 : i32
    %c0_i32_1 = arith.constant 0 : i32
    return %c0_i32, %c0_i32_0 : i32, i32
  }
  func.func @transform_5(%arg0: i32) -> (i32, i32) {
    %c0_i32 = arith.constant 0 : i32
    %c0_i32_0 = arith.constant 0 : i32
    %c0_i32_1 = arith.constant 0 : i32
    return %c0_i32, %c0_i32_0 : i32, i32
  }
  func.func @transform_6(%arg0: i32) -> (i32, i32) {
    %c0_i32 = arith.constant 0 : i32
    %c0_i32_0 = arith.constant 0 : i32
    %c0_i32_1 = arith.constant 0 : i32
    return %c0_i32, %c0_i32_0 : i32, i32
  }
  func.func @transform_7(%arg0: i32) -> (i32, i32) {
    %c0_i32 = arith.constant 0 : i32
    %c0_i32_0 = arith.constant 0 : i32
    return %arg0, %c0_i32 : i32, i32
  }
}

</mosaic_0001>

<llo_original>
// kernel: tpu_custom_call.1
$region0: #{tpu_custom_call.1}
  #allocation0 [shape = 'u32[]', space=smem, size = 0x4, offset = 0x4, fixed_abs, tag = 'smem constant byte address 0x4 - core index']
  #allocation1 [shape = 'u32[72,128]{1,0:T(1,128)}', space=vmem, size = 0x9000, scoped, tag = 'internal scratch']
  %s0 = inlined_call_operand.hbm [shape: bf16[8,128], index: 0, kind: input, shape index: {}]
  %s1 = inlined_call_operand.hbm [shape: bf16[128,128], index: 1, kind: input, shape index: {}]
  %s2 = inlined_call_operand.vmem [shape: f32[1,128], index: 2, kind: input, shape index: {}]
  %s3 = inlined_call_operand.hbm [shape: bf16[128,128], index: 3, kind: input, shape index: {}]
  %s4 = inlined_call_operand.vmem [shape: f32[1,128], index: 4, kind: input, shape index: {}]
  %s5 = inlined_call_operand.hbm [shape: bf16[128,128], index: 5, kind: input, shape index: {}]
  %s6 = inlined_call_operand.vmem [shape: f32[1,128], index: 6, kind: input, shape index: {}]
  %s7 = inlined_call_operand.hbm [shape: f32[8,128], index: 7, kind: output, shape index: {}]
  %s8 = sld [smem:[#allocation0]]
  $region54: #{tpu_custom_call.1} parent=0
    _
  %s10 = ssub.s32 1, %s8
  %s11 = scalar_select 0, %s10, %s8
  $region1: #{tpu_custom_call.1} parent=0
    #allocation2 [shape = 'u8[2048]{0}', space=vmem, size = 0x800, scoped, tag = 'input window, operand 0, single buffered']
    #allocation3 [shape = 's32[1]{0}', space=sflag, size = 0x4, scoped, tag = 'scoped memory for tpu_custom_call.1']
    #allocation4 [shape = 's32[1]{0}', space=sflag, size = 0x4, scoped, tag = 'scoped memory for tpu_custom_call.1']
    #allocation5 [shape = 'u8[32768]{0}', space=vmem, size = 0x8000, scoped, tag = 'input window, operand 1, single buffered']
    #allocation6 [shape = 's32[1]{0}', space=sflag, size = 0x4, scoped, tag = 'scoped memory for tpu_custom_call.1']
    #allocation7 [shape = 'u8[32768]{0}', space=vmem, size = 0x8000, scoped, tag = 'input window, operand 3, single buffered']
    #allocation8 [shape = 'u8[32768]{0}', space=vmem, size = 0x8000, scoped, tag = 'input window, operand 5, single buffered']
    #allocation9 [shape = 's32[1]{0}', space=sflag, size = 0x4, scoped, tag = 'scoped memory for tpu_custom_call.1']
    #allocation10 [shape = 'u8[4096]{0}', space=vmem, size = 0x1000, scoped, tag = 'output window, operand 0, single buffered']
    %12 = vsyncpa [#allocation3], 0
    %13 = vsyncpa [#allocation6], 0
    %14 = vsyncpa [#allocation9], 0
    %15 = vsyncpa [#allocation4], 0
    // Predicated region
    $region2: #{tpu_custom_call.1} parent=1 // pred_check
      _
    $region3: #{tpu_custom_call.1} parent=1 // pred_check_branch
      %17 = sbr.rel (0) target = $region5
    $region4: #{tpu_custom_call.1} parent=1 // pred_region
      %19 = vsyncadd [#allocation3], 0
      %s21 = sshll.u32 %s0, 4
      %s22 = int_to_ptr.hbm [resolvable:$true] %s21
      %s23 = sshll.u32 [#allocation2], 4
      %s24 = int_to_ptr.vmem [resolvable:$true] %s23
      %26 = dma.hbm_to_vmem [thread:$0]  %s22, 64, %s24, [#allocation3]
    $region5: #{tpu_custom_call.1} parent=1 // pred_fallthru
      _
    // Predicated region
    $region6: #{tpu_custom_call.1} parent=1 // pred_check
      _
    $region7: #{tpu_custom_call.1} parent=1 // pred_check_branch
      %28 = sbr.rel (0) target = $region9
    $region8: #{tpu_custom_call.1} parent=1 // pred_region
      %30 = vsyncadd [#allocation6], 0
      %s31 = sshll.u32 %s1, 4
      %s32 = int_to_ptr.hbm [resolvable:$true] %s31
      %s33 = sshll.u32 [#allocation5], 4
      %s34 = int_to_ptr.vmem [resolvable:$true] %s33
      %39 = dma.hbm_to_vmem [thread:$0]  %s32, 1024, %s34, [#allocation6], 64, 64, 4
    $region9: #{tpu_custom_call.1} parent=1 // pred_fallthru
      _
    // Predicated region
    $region10: #{tpu_custom_call.1} parent=1 // pred_check
      _
    $region11: #{tpu_custom_call.1} parent=1 // pred_check_branch
      %41 = sbr.rel (0) target = $region13
    $region12: #{tpu_custom_call.1} parent=1 // pred_region
      _
    $region13: #{tpu_custom_call.1} parent=1 // pred_fallthru
      _
    // Predicated region
    $region14: #{tpu_custom_call.1} parent=1 // pred_check
      _
    $region15: #{tpu_custom_call.1} parent=1 // pred_check_branch
      %43 = sbr.rel (0) target = $region17
    $region16: #{tpu_custom_call.1} parent=1 // pred_region
      %45 = vsyncadd [#allocation6], 0
      %s46 = sshll.u32 %s3, 4
      %s47 = int_to_ptr.hbm [resolvable:$true] %s46
      %s48 = sshll.u32 [#allocation7], 4
      %s49 = int_to_ptr.vmem [resolvable:$true] %s48
      %54 = dma.hbm_to_vmem [thread:$0]  %s47, 1024, %s49, [#allocation6], 64, 64, 4
    $region17: #{tpu_custom_call.1} parent=1 // pred_fallthru
      _
    // Predicated region
    $region18: #{tpu_custom_call.1} parent=1 // pred_check
      _
    $region19: #{tpu_custom_call.1} parent=1 // pred_check_branch
      %56 = sbr.rel (0) target = $region21
    $region20: #{tpu_custom_call.1} parent=1 // pred_region
      _
    $region21: #{tpu_custom_call.1} parent=1 // pred_fallthru
      _
    // Predicated region
    $region22: #{tpu_custom_call.1} parent=1 // pred_check
      _
    $region23: #{tpu_custom_call.1} parent=1 // pred_check_branch
      %58 = sbr.rel (0) target = $region25
    $region24: #{tpu_custom_call.1} parent=1 // pred_region
      %60 = vsyncadd [#allocation9], 0
      %s61 = sshll.u32 %s5, 4
      %s62 = int_to_ptr.hbm [resolvable:$true] %s61
      %s63 = sshll.u32 [#allocation8], 4
      %s64 = int_to_ptr.vmem [resolvable:$true] %s63
      %69 = dma.hbm_to_vmem [thread:$0]  %s62, 1024, %s64, [#allocation9], 64, 64, 4
    $region25: #{tpu_custom_call.1} parent=1 // pred_fallthru
      _
    // Predicated region
    $region26: #{tpu_custom_call.1} parent=1 // pred_check
      _
    $region27: #{tpu_custom_call.1} parent=1 // pred_check_branch
      %71 = sbr.rel (0) target = $region29
    $region28: #{tpu_custom_call.1} parent=1 // pred_region
      _
    $region29: #{tpu_custom_call.1} parent=1 // pred_fallthru
      _
    // Predicated region
    $region30: #{tpu_custom_call.1} parent=1 // pred_check
      _
    $region31: #{tpu_custom_call.1} parent=1 // pred_check_branch
      %73 = sbr.rel (0) target = $region33
    $region32: #{tpu_custom_call.1} parent=1 // pred_region
      %75 = dma.done [#allocation3], 64
    $region33: #{tpu_custom_call.1} parent=1 // pred_fallthru
      _
    // Predicated region
    $region34: #{tpu_custom_call.1} parent=1 // pred_check
      _
    $region35: #{tpu_custom_call.1} parent=1 // pred_check_branch
      %77 = sbr.rel (0) target = $region37
    $region36: #{tpu_custom_call.1} parent=1 // pred_region
      %79 = dma.done [#allocation6], 1024
    $region37: #{tpu_custom_call.1} parent=1 // pred_fallthru
      _
    // Predicated region
    $region38: #{tpu_custom_call.1} parent=1 // pred_check
      _
    $region39: #{tpu_custom_call.1} parent=1 // pred_check_branch
      %81 = sbr.rel (0) target = $region41
    $region40: #{tpu_custom_call.1} parent=1 // pred_region
      %83 = dma.done [#allocation6], 1024
    $region41: #{tpu_custom_call.1} parent=1 // pred_fallthru
      _
    // Predicated region
    $region42: #{tpu_custom_call.1} parent=1 // pred_check
      _
    $region43: #{tpu_custom_call.1} parent=1 // pred_check_branch
      %85 = sbr.rel (0) target = $region45
    $region44: #{tpu_custom_call.1} parent=1 // pred_region
      %87 = dma.done [#allocation9], 1024
    $region45: #{tpu_custom_call.1} parent=1 // pred_fallthru
      _
    %v88 = vld [vmem:[#allocation2] sm:$0xf]
    %v89 = vld [vmem:[#allocation5] sm:$0xf]
    %v90 = vld [vmem:[#allocation5 + $0x4] sm:$0xf]
    %v91 = vld [vmem:[#allocation5 + $0x8] sm:$0xf]
    %v92 = vld [vmem:[#allocation5 + $0xc] sm:$0xf]
    %v93 = vld [vmem:[#allocation5 + $0x10] sm:$0xf]
    %v94 = vld [vmem:[#allocation5 + $0x14] sm:$0xf]
    %v95 = vld [vmem:[#allocation5 + $0x18] sm:$0xf]
    %v96 = vld [vmem:[#allocation5 + $0x1c] sm:$0xf]
    %v97 = vld [vmem:[#allocation5 + $0x20] sm:$0xf]
    %v98 = vld [vmem:[#allocation5 + $0x24] sm:$0xf]
    %v99 = vld [vmem:[#allocation5 + $0x28] sm:$0xf]
    %v100 = vld [vmem:[#allocation5 + $0x2c] sm:$0xf]
    %v101 = vld [vmem:[#allocation5 + $0x30] sm:$0xf]
    %v102 = vld [vmem:[#allocation5 + $0x34] sm:$0xf]
    %v103 = vld [vmem:[#allocation5 + $0x38] sm:$0xf]
    %v104 = vld [vmem:[#allocation5 + $0x3c] sm:$0xf]
    %v105 = vld [vmem:[%s2] sm:$0x1]
    %v107 = vperm.slane %v105, 0
    %v125 = vunpack.c.l.b16 %v89
    %v126 = vunpack.c.l.b16 %v90
    %v127 = vunpack.c.l.b16 %v91
    %v128 = vunpack.c.l.b16 %v92
    %v129 = vunpack.c.l.b16 %v93
    %v130 = vunpack.c.l.b16 %v94
    %v131 = vunpack.c.l.b16 %v95
    %v132 = vunpack.c.l.b16 %v96
    %v133 = vunpack.c.l.b16 %v97
    %v134 = vunpack.c.l.b16 %v98
    %v135 = vunpack.c.l.b16 %v99
    %v136 = vunpack.c.l.b16 %v100
    %v137 = vunpack.c.l.b16 %v101
    %v138 = vunpack.c.l.b16 %v102
    %v139 = vunpack.c.l.b16 %v103
    %v140 = vunpack.c.l.b16 %v104
    %v141 = vpack.c.b16 %v126, %v125
    %v142 = vpack.c.b16 %v128, %v127
    %v143 = vpack.c.b16 %v130, %v129
    %v144 = vpack.c.b16 %v132, %v131
    %v145 = vpack.c.b16 %v134, %v133
    %v146 = vpack.c.b16 %v136, %v135
    %v147 = vpack.c.b16 %v138, %v137
    %v148 = vpack.c.b16 %v140, %v139
    %157 = vmatpush.bf16.msra.mxu0 %v148
    %158 = vmatpush.bf16.msra.mxu0 %v147
    %159 = vmatpush.bf16.msra.mxu0 %v146
    %160 = vmatpush.bf16.msra.mxu0 %v145
    %161 = vmatpush.bf16.msra.mxu0 %v144
    %162 = vmatpush.bf16.msra.mxu0 %v143
    %163 = vmatpush.bf16.msra.mxu0 %v142
    %164 = vmatpush.bf16.msra.mxu0 %v141
    %165 = vmatmul.bf16.gmra.mxu0 %v88
    %v166 = vpop.f32.mrf.mxu0
    %v167 = vadd.f32 %v107, %v166
    %v168 = vpop.f32.mrf.mxu0
    %169 = vdwg.mxu0
    %v170 = vmax.f32 %v167, 0.0
    %v171 = vpack.c.bf16 %v170, %v170
    %v172 = vld [vmem:[#allocation7] sm:$0xf]
    %v173 = vld [vmem:[#allocation7 + $0x4] sm:$0xf]
    %v174 = vld [vmem:[#allocation7 + $0x8] sm:$0xf]
    %v175 = vld [vmem:[#allocation7 + $0xc] sm:$0xf]
    %v176 = vld [vmem:[#allocation7 + $0x10] sm:$0xf]
    %v177 = vld [vmem:[#allocation7 + $0x14] sm:$0xf]
    %v178 = vld [vmem:[#allocation7 + $0x18] sm:$0xf]
    %v179 = vld [vmem:[#allocation7 + $0x1c] sm:$0xf]
    %v180 = vld [vmem:[#allocation7 + $0x20] sm:$0xf]
    %v181 = vld [vmem:[#allocation7 + $0x24] sm:$0xf]
    %v182 = vld [vmem:[#allocation7 + $0x28] sm:$0xf]
    %v183 = vld [vmem:[#allocation7 + $0x2c] sm:$0xf]
    %v184 = vld [vmem:[#allocation7 + $0x30] sm:$0xf]
    %v185 = vld [vmem:[#allocation7 + $0x34] sm:$0xf]
    %v186 = vld [vmem:[#allocation7 + $0x38] sm:$0xf]
    %v187 = vld [vmem:[#allocation7 + $0x3c] sm:$0xf]
    %v188 = vld [vmem:[%s4] sm:$0x1]
    %v190 = vperm.slane %v188, 0
    %v208 = vunpack.c.l.b16 %v172
    %v209 = vunpack.c.l.b16 %v173
    %v210 = vunpack.c.l.b16 %v174
    %v211 = vunpack.c.l.b16 %v175
    %v212 = vunpack.c.l.b16 %v176
    %v213 = vunpack.c.l.b16 %v177
    %v214 = vunpack.c.l.b16 %v178
    %v215 = vunpack.c.l.b16 %v179
    %v216 = vunpack.c.l.b16 %v180
    %v217 = vunpack.c.l.b16 %v181
    %v218 = vunpack.c.l.b16 %v182
    %v219 = vunpack.c.l.b16 %v183
    %v220 = vunpack.c.l.b16 %v184
    %v221 = vunpack.c.l.b16 %v185
    %v222 = vunpack.c.l.b16 %v186
    %v223 = vunpack.c.l.b16 %v187
    %v224 = vpack.c.b16 %v209, %v208
    %v225 = vpack.c.b16 %v211, %v210
    %v226 = vpack.c.b16 %v213, %v212
    %v227 = vpack.c.b16 %v215, %v214
    %v228 = vpack.c.b16 %v217, %v216
    %v229 = vpack.c.b16 %v219, %v218
    %v230 = vpack.c.b16 %v221, %v220
    %v231 = vpack.c.b16 %v223, %v222
    %240 = vmatpush.bf16.msra.mxu0 %v231
    %241 = vmatpush.bf16.msra.mxu0 %v230
    %242 = vmatpush.bf16.msra.mxu0 %v229
    %243 = vmatpush.bf16.msra.mxu0 %v228
    %244 = vmatpush.bf16.msra.mxu0 %v227
    %245 = vmatpush.bf16.msra.mxu0 %v226
    %246 = vmatpush.bf16.msra.mxu0 %v225
    %247 = vmatpush.bf16.msra.mxu0 %v224
    %248 = vmatmul.bf16.gmra.mxu0 %v171
    %v249 = vpop.f32.mrf.mxu0
    %v250 = vadd.f32 %v190, %v249
    %v251 = vpop.f32.mrf.mxu0
    %252 = vdwg.mxu0
    %v253 = vmax.f32 %v250, 0.0
    %v254 = vpack.c.bf16 %v253, %v253
    %v255 = vld [vmem:[#allocation8] sm:$0xf]
    %v256 = vld [vmem:[#allocation8 + $0x4] sm:$0xf]
    %v257 = vld [vmem:[#allocation8 + $0x8] sm:$0xf]
    %v258 = vld [vmem:[#allocation8 + $0xc] sm:$0xf]
    %v259 = vld [vmem:[#allocation8 + $0x10] sm:$0xf]
    %v260 = vld [vmem:[#allocation8 + $0x14] sm:$0xf]
    %v261 = vld [vmem:[#allocation8 + $0x18] sm:$0xf]
    %v262 = vld [vmem:[#allocation8 + $0x1c] sm:$0xf]
    %v263 = vld [vmem:[#allocation8 + $0x20] sm:$0xf]
    %v264 = vld [vmem:[#allocation8 + $0x24] sm:$0xf]
    %v265 = vld [vmem:[#allocation8 + $0x28] sm:$0xf]
    %v266 = vld [vmem:[#allocation8 + $0x2c] sm:$0xf]
    %v267 = vld [vmem:[#allocation8 + $0x30] sm:$0xf]
    %v268 = vld [vmem:[#allocation8 + $0x34] sm:$0xf]
    %v269 = vld [vmem:[#allocation8 + $0x38] sm:$0xf]
    %v270 = vld [vmem:[#allocation8 + $0x3c] sm:$0xf]
    %v271 = vld [vmem:[%s6] sm:$0x1]
    %v273 = vperm.slane %v271, 0
    %v291 = vunpack.c.l.b16 %v255
    %v292 = vunpack.c.l.b16 %v256
    %v293 = vunpack.c.l.b16 %v257
    %v294 = vunpack.c.l.b16 %v258
    %v295 = vunpack.c.l.b16 %v259
    %v296 = vunpack.c.l.b16 %v260
    %v297 = vunpack.c.l.b16 %v261
    %v298 = vunpack.c.l.b16 %v262
    %v299 = vunpack.c.l.b16 %v263
    %v300 = vunpack.c.l.b16 %v264
    %v301 = vunpack.c.l.b16 %v265
    %v302 = vunpack.c.l.b16 %v266
    %v303 = vunpack.c.l.b16 %v267
    %v304 = vunpack.c.l.b16 %v268
    %v305 = vunpack.c.l.b16 %v269
    %v306 = vunpack.c.l.b16 %v270
    %v307 = vpack.c.b16 %v292, %v291
    %v308 = vpack.c.b16 %v294, %v293
    %v309 = vpack.c.b16 %v296, %v295
    %v310 = vpack.c.b16 %v298, %v297
    %v311 = vpack.c.b16 %v300, %v299
    %v312 = vpack.c.b16 %v302, %v301
    %v313 = vpack.c.b16 %v304, %v303
    %v314 = vpack.c.b16 %v306, %v305
    %323 = vmatpush.bf16.msra.mxu0 %v314
    %324 = vmatpush.bf16.msra.mxu0 %v313
    %325 = vmatpush.bf16.msra.mxu0 %v312
    %326 = vmatpush.bf16.msra.mxu0 %v311
    %327 = vmatpush.bf16.msra.mxu0 %v310
    %328 = vmatpush.bf16.msra.mxu0 %v309
    %329 = vmatpush.bf16.msra.mxu0 %v308
    %330 = vmatpush.bf16.msra.mxu0 %v307
    %331 = vmatmul.bf16.gmra.mxu0 %v254
    %v332 = vpop.f32.mrf.mxu0
    %v333 = vadd.f32 %v273, %v332
    %v334 = vpop.f32.mrf.mxu0
    %335 = vdwg.mxu0
    %336 = vst [vmem:[#allocation10] sm:$0xff] %v333
    // Predicated region
    $region46: #{tpu_custom_call.1} parent=1 // pred_check
      _
    $region47: #{tpu_custom_call.1} parent=1 // pred_check_branch
      %338 = sbr.rel (0) target = $region49
    $region48: #{tpu_custom_call.1} parent=1 // pred_region
      %340 = vsyncadd [#allocation4], 0
      %s342 = sshll.u32 [#allocation10], 4
      %s343 = int_to_ptr.vmem [resolvable:$true] %s342
      %s344 = sshll.u32 %s7, 4
      %s345 = int_to_ptr.hbm [resolvable:$true] %s344
      %347 = dma.vmem_to_hbm [thread:$0]  %s343, 128, %s345, [#allocation4]
    $region49: #{tpu_custom_call.1} parent=1 // pred_fallthru
      _
    // Predicated region
    $region50: #{tpu_custom_call.1} parent=1 // pred_check
      _
    $region51: #{tpu_custom_call.1} parent=1 // pred_check_branch
      %349 = sbr.rel (0) target = $region53
    $region52: #{tpu_custom_call.1} parent=1 // pred_region
      %351 = dma.done [#allocation4], 128
    $region53: #{tpu_custom_call.1} parent=1 // pred_fallthru
      _
    %352 = vsyncpa [#allocation3], 1
    %353 = vsyncpa [#allocation6], 1
    %354 = vsyncpa [#allocation9], 1
    %355 = vsyncpa [#allocation4], 1

// kernel: tpu_custom_call.1
$region0: #{tpu_custom_call.1}
  #allocation0 [shape = 'u32[]', space=smem, size = 0x4, offset = 0x4, fixed_abs, tag = 'smem constant byte address 0x4 - core index']
  #allocation1 [shape = 'u32[72,128]{1,0:T(1,128)}', space=vmem, size = 0x9000, scoped, tag = 'internal scratch']
  %s0 = inlined_call_operand.hbm [shape: bf16[8,128], index: 0, kind: input, shape index: {}]
  %s1 = inlined_call_operand.hbm [shape: bf16[128,128], index: 1, kind: input, shape index: {}]
  %s2 = inlined_call_operand.vmem [shape: f32[1,128], index: 2, kind: input, shape index: {}]
  %s3 = inlined_call_operand.hbm [shape: bf16[128,128], index: 3, kind: input, shape index: {}]
  %s4 = inlined_call_operand.vmem [shape: f32[1,128], index: 4, kind: input, shape index: {}]
  %s5 = inlined_call_operand.hbm [shape: bf16[128,128], index: 5, kind: input, shape index: {}]
  %s6 = inlined_call_operand.vmem [shape: f32[1,128], index: 6, kind: input, shape index: {}]
  %s7 = inlined_call_operand.hbm [shape: f32[8,128], index: 7, kind: output, shape index: {}]
  %s8 = sld [smem:[#allocation0]]
  $region54: #{tpu_custom_call.1} parent=0
    _
  %s10 = ssub.s32 1, %s8
  %s11 = scalar_select 0, %s10, %s8
  $region1: #{tpu_custom_call.1} parent=0
    #allocation2 [shape = 'u8[2048]{0}', space=vmem, size = 0x800, scoped, tag = 'input window, operand 0, single buffered']
    #allocation3 [shape = 's32[1]{0}', space=sflag, size = 0x4, scoped, tag = 'scoped memory for tpu_custom_call.1']
    #allocation4 [shape = 's32[1]{0}', space=sflag, size = 0x4, scoped, tag = 'scoped memory for tpu_custom_call.1']
    #allocation5 [shape = 'u8[32768]{0}', space=vmem, size = 0x8000, scoped, tag = 'input window, operand 1, single buffered']
    #allocation6 [shape = 's32[1]{0}', space=sflag, size = 0x4, scoped, tag = 'scoped memory for tpu_custom_call.1']
    #allocation7 [shape = 'u8[32768]{0}', space=vmem, size = 0x8000, scoped, tag = 'input window, operand 3, single buffered']
    #allocation8 [shape = 'u8[32768]{0}', space=vmem, size = 0x8000, scoped, tag = 'input window, operand 5, single buffered']
    #allocation9 [shape = 's32[1]{0}', space=sflag, size = 0x4, scoped, tag = 'scoped memory for tpu_custom_call.1']
    #allocation10 [shape = 'u8[4096]{0}', space=vmem, size = 0x1000, scoped, tag = 'output window, operand 0, single buffered']
    %12 = vsyncpa [#allocation3], 0
    %13 = vsyncpa [#allocation6], 0
    %14 = vsyncpa [#allocation9], 0
    %15 = vsyncpa [#allocation4], 0
    // Predicated region
    $region2: #{tpu_custom_call.1} parent=1 // pred_check
      _
    $region3: #{tpu_custom_call.1} parent=1 // pred_check_branch
      %17 = sbr.rel (0) target = $region5
    $region4: #{tpu_custom_call.1} parent=1 // pred_region
      %19 = vsyncadd [#allocation3], 0
      %s21 = sshll.u32 %s0, 4
      %s22 = int_to_ptr.hbm [resolvable:$true] %s21
      %s23 = sshll.u32 [#allocation2], 4
      %s24 = int_to_ptr.vmem [resolvable:$true] %s23
      %26 = dma.hbm_to_vmem [thread:$0]  %s22, 64, %s24, [#allocation3]
    $region5: #{tpu_custom_call.1} parent=1 // pred_fallthru
      _
    // Predicated region
    $region6: #{tpu_custom_call.1} parent=1 // pred_check
      _
    $region7: #{tpu_custom_call.1} parent=1 // pred_check_branch
      %28 = sbr.rel (0) target = $region9
    $region8: #{tpu_custom_call.1} parent=1 // pred_region
      %30 = vsyncadd [#allocation6], 0
      %s31 = sshll.u32 %s1, 4
      %s32 = int_to_ptr.hbm [resolvable:$true] %s31
      %s33 = sshll.u32 [#allocation5], 4
      %s34 = int_to_ptr.vmem [resolvable:$true] %s33
      %39 = dma.hbm_to_vmem [thread:$0]  %s32, 1024, %s34, [#allocation6], 64, 64, 4
    $region9: #{tpu_custom_call.1} parent=1 // pred_fallthru
      _
    // Predicated region
    $region10: #{tpu_custom_call.1} parent=1 // pred_check
      _
    $region11: #{tpu_custom_call.1} parent=1 // pred_check_branch
      %41 = sbr.rel (0) target = $region13
    $region12: #{tpu_custom_call.1} parent=1 // pred_region
      _
    $region13: #{tpu_custom_call.1} parent=1 // pred_fallthru
      _
    // Predicated region
    $region14: #{tpu_custom_call.1} parent=1 // pred_check
      _
    $region15: #{tpu_custom_call.1} parent=1 // pred_check_branch
      %43 = sbr.rel (0) target = $region17
    $region16: #{tpu_custom_call.1} parent=1 // pred_region
      %45 = vsyncadd [#allocation6], 0
      %s46 = sshll.u32 %s3, 4
      %s47 = int_to_ptr.hbm [resolvable:$true] %s46
      %s48 = sshll.u32 [#allocation7], 4
      %s49 = int_to_ptr.vmem [resolvable:$true] %s48
      %54 = dma.hbm_to_vmem [thread:$0]  %s47, 1024, %s49, [#allocation6], 64, 64, 4
    $region17: #{tpu_custom_call.1} parent=1 // pred_fallthru
      _
    // Predicated region
    $region18: #{tpu_custom_call.1} parent=1 // pred_check
      _
    $region19: #{tpu_custom_call.1} parent=1 // pred_check_branch
      %56 = sbr.rel (0) target = $region21
    $region20: #{tpu_custom_call.1} parent=1 // pred_region
      _
    $region21: #{tpu_custom_call.1} parent=1 // pred_fallthru
      _
    // Predicated region
    $region22: #{tpu_custom_call.1} parent=1 // pred_check
      _
    $region23: #{tpu_custom_call.1} parent=1 // pred_check_branch
      %58 = sbr.rel (0) target = $region25
    $region24: #{tpu_custom_call.1} parent=1 // pred_region
      %60 = vsyncadd [#allocation9], 0
      %s61 = sshll.u32 %s5, 4
      %s62 = int_to_ptr.hbm [resolvable:$true] %s61
      %s63 = sshll.u32 [#allocation8], 4
      %s64 = int_to_ptr.vmem [resolvable:$true] %s63
      %69 = dma.hbm_to_vmem [thread:$0]  %s62, 1024, %s64, [#allocation9], 64, 64, 4
    $region25: #{tpu_custom_call.1} parent=1 // pred_fallthru
      _
    // Predicated region
    $region26: #{tpu_custom_call.1} parent=1 // pred_check
      _
    $region27: #{tpu_custom_call.1} parent=1 // pred_check_branch
      %71 = sbr.rel (0) target = $region29
    $region28: #{tpu_custom_call.1} parent=1 // pred_region
      _
    $region29: #{tpu_custom_call.1} parent=1 // pred_fallthru
      _
    // Predicated region
    $region30: #{tpu_custom_call.1} parent=1 // pred_check
      _
    $region31: #{tpu_custom_call.1} parent=1 // pred_check_branch
      %73 = sbr.rel (0) target = $region33
    $region32: #{tpu_custom_call.1} parent=1 // pred_region
      %75 = dma.done [#allocation3], 64
    $region33: #{tpu_custom_call.1} parent=1 // pred_fallthru
      _
    // Predicated region
    $region34: #{tpu_custom_call.1} parent=1 // pred_check
      _
    $region35: #{tpu_custom_call.1} parent=1 // pred_check_branch
      %77 = sbr.rel (0) target = $region37
    $region36: #{tpu_custom_call.1} parent=1 // pred_region
      %79 = dma.done [#allocation6], 1024
    $region37: #{tpu_custom_call.1} parent=1 // pred_fallthru
      _
    // Predicated region
    $region38: #{tpu_custom_call.1} parent=1 // pred_check
      _
    $region39: #{tpu_custom_call.1} parent=1 // pred_check_branch
      %81 = sbr.rel (0) target = $region41
    $region40: #{tpu_custom_call.1} parent=1 // pred_region
      %83 = dma.done [#allocation6], 1024
    $region41: #{tpu_custom_call.1} parent=1 // pred_fallthru
      _
    // Predicated region
    $region42: #{tpu_custom_call.1} parent=1 // pred_check
      _
    $region43: #{tpu_custom_call.1} parent=1 // pred_check_branch
      %85 = sbr.rel (0) target = $region45
    $region44: #{tpu_custom_call.1} parent=1 // pred_region
      %87 = dma.done [#allocation9], 1024
    $region45: #{tpu_custom_call.1} parent=1 // pred_fallthru
      _
    %v88 = vld [vmem:[#allocation2] sm:$0xf]
    %v89 = vld [vmem:[#allocation5] sm:$0xf]
    %v90 = vld [vmem:[#allocation5 + $0x4] sm:$0xf]
    %v91 = vld [vmem:[#allocation5 + $0x8] sm:$0xf]
    %v92 = vld [vmem:[#allocation5 + $0xc] sm:$0xf]
    %v93 = vld [vmem:[#allocation5 + $0x10] sm:$0xf]
    %v94 = vld [vmem:[#allocation5 + $0x14] sm:$0xf]
    %v95 = vld [vmem:[#allocation5 + $0x18] sm:$0xf]
    %v96 = vld [vmem:[#allocation5 + $0x1c] sm:$0xf]
    %v97 = vld [vmem:[#allocation5 + $0x20] sm:$0xf]
    %v98 = vld [vmem:[#allocation5 + $0x24] sm:$0xf]
    %v99 = vld [vmem:[#allocation5 + $0x28] sm:$0xf]
    %v100 = vld [vmem:[#allocation5 + $0x2c] sm:$0xf]
    %v101 = vld [vmem:[#allocation5 + $0x30] sm:$0xf]
    %v102 = vld [vmem:[#allocation5 + $0x34] sm:$0xf]
    %v103 = vld [vmem:[#allocation5 + $0x38] sm:$0xf]
    %v104 = vld [vmem:[#allocation5 + $0x3c] sm:$0xf]
    %v105 = vld [vmem:[%s2] sm:$0x1]
    %v107 = vperm.slane %v105, 0
    %v125 = vunpack.c.l.b16 %v89
    %v126 = vunpack.c.l.b16 %v90
    %v127 = vunpack.c.l.b16 %v91
    %v128 = vunpack.c.l.b16 %v92
    %v129 = vunpack.c.l.b16 %v93
    %v130 = vunpack.c.l.b16 %v94
    %v131 = vunpack.c.l.b16 %v95
    %v132 = vunpack.c.l.b16 %v96
    %v133 = vunpack.c.l.b16 %v97
    %v134 = vunpack.c.l.b16 %v98
    %v135 = vunpack.c.l.b16 %v99
    %v136 = vunpack.c.l.b16 %v100
    %v137 = vunpack.c.l.b16 %v101
    %v138 = vunpack.c.l.b16 %v102
    %v139 = vunpack.c.l.b16 %v103
    %v140 = vunpack.c.l.b16 %v104
    %v141 = vpack.c.b16 %v126, %v125
    %v142 = vpack.c.b16 %v128, %v127
    %v143 = vpack.c.b16 %v130, %v129
    %v144 = vpack.c.b16 %v132, %v131
    %v145 = vpack.c.b16 %v134, %v133
    %v146 = vpack.c.b16 %v136, %v135
    %v147 = vpack.c.b16 %v138, %v137
    %v148 = vpack.c.b16 %v140, %v139
    %157 = vmatpush.bf16.msra.mxu0 %v148
    %158 = vmatpush.bf16.msra.mxu0 %v147
    %159 = vmatpush.bf16.msra.mxu0 %v146
    %160 = vmatpush.bf16.msra.mxu0 %v145
    %161 = vmatpush.bf16.msra.mxu0 %v144
    %162 = vmatpush.bf16.msra.mxu0 %v143
    %163 = vmatpush.bf16.msra.mxu0 %v142
    %164 = vmatpush.bf16.msra.mxu0 %v141
    %165 = vmatmul.bf16.gmra.mxu0 %v88
    %v166 = vpop.f32.mrf.mxu0
    %v167 = vadd.f32 %v107, %v166
    %v168 = vpop.f32.mrf.mxu0
    %169 = vdwg.mxu0
    %v170 = vmax.f32 %v167, 0.0
    %v171 = vpack.c.bf16 %v170, %v170
    %v172 = vld [vmem:[#allocation7] sm:$0xf]
    %v173 = vld [vmem:[#allocation7 + $0x4] sm:$0xf]
    %v174 = vld [vmem:[#allocation7 + $0x8] sm:$0xf]
    %v175 = vld [vmem:[#allocation7 + $0xc] sm:$0xf]
    %v176 = vld [vmem:[#allocation7 + $0x10] sm:$0xf]
    %v177 = vld [vmem:[#allocation7 + $0x14] sm:$0xf]
    %v178 = vld [vmem:[#allocation7 + $0x18] sm:$0xf]
    %v179 = vld [vmem:[#allocation7 + $0x1c] sm:$0xf]
    %v180 = vld [vmem:[#allocation7 + $0x20] sm:$0xf]
    %v181 = vld [vmem:[#allocation7 + $0x24] sm:$0xf]
    %v182 = vld [vmem:[#allocation7 + $0x28] sm:$0xf]
    %v183 = vld [vmem:[#allocation7 + $0x2c] sm:$0xf]
    %v184 = vld [vmem:[#allocation7 + $0x30] sm:$0xf]
    %v185 = vld [vmem:[#allocation7 + $0x34] sm:$0xf]
    %v186 = vld [vmem:[#allocation7 + $0x38] sm:$0xf]
    %v187 = vld [vmem:[#allocation7 + $0x3c] sm:$0xf]
    %v188 = vld [vmem:[%s4] sm:$0x1]
    %v190 = vperm.slane %v188, 0
    %v208 = vunpack.c.l.b16 %v172
    %v209 = vunpack.c.l.b16 %v173
    %v210 = vunpack.c.l.b16 %v174
    %v211 = vunpack.c.l.b16 %v175
    %v212 = vunpack.c.l.b16 %v176
    %v213 = vunpack.c.l.b16 %v177
    %v214 = vunpack.c.l.b16 %v178
    %v215 = vunpack.c.l.b16 %v179
    %v216 = vunpack.c.l.b16 %v180
    %v217 = vunpack.c.l.b16 %v181
    %v218 = vunpack.c.l.b16 %v182
    %v219 = vunpack.c.l.b16 %v183
    %v220 = vunpack.c.l.b16 %v184
    %v221 = vunpack.c.l.b16 %v185
    %v222 = vunpack.c.l.b16 %v186
    %v223 = vunpack.c.l.b16 %v187
    %v224 = vpack.c.b16 %v209, %v208
    %v225 = vpack.c.b16 %v211, %v210
    %v226 = vpack.c.b16 %v213, %v212
    %v227 = vpack.c.b16 %v215, %v214
    %v228 = vpack.c.b16 %v217, %v216
    %v229 = vpack.c.b16 %v219, %v218
    %v230 = vpack.c.b16 %v221, %v220
    %v231 = vpack.c.b16 %v223, %v222
    %240 = vmatpush.bf16.msra.mxu0 %v231
    %241 = vmatpush.bf16.msra.mxu0 %v230
    %242 = vmatpush.bf16.msra.mxu0 %v229
    %243 = vmatpush.bf16.msra.mxu0 %v228
    %244 = vmatpush.bf16.msra.mxu0 %v227
    %245 = vmatpush.bf16.msra.mxu0 %v226
    %246 = vmatpush.bf16.msra.mxu0 %v225
    %247 = vmatpush.bf16.msra.mxu0 %v224
    %248 = vmatmul.bf16.gmra.mxu0 %v171
    %v249 = vpop.f32.mrf.mxu0
    %v250 = vadd.f32 %v190, %v249
    %v251 = vpop.f32.mrf.mxu0
    %252 = vdwg.mxu0
    %v253 = vmax.f32 %v250, 0.0
    %v254 = vpack.c.bf16 %v253, %v253
    %v255 = vld [vmem:[#allocation8] sm:$0xf]
    %v256 = vld [vmem:[#allocation8 + $0x4] sm:$0xf]
    %v257 = vld [vmem:[#allocation8 + $0x8] sm:$0xf]
    %v258 = vld [vmem:[#allocation8 + $0xc] sm:$0xf]
    %v259 = vld [vmem:[#allocation8 + $0x10] sm:$0xf]
    %v260 = vld [vmem:[#allocation8 + $0x14] sm:$0xf]
    %v261 = vld [vmem:[#allocation8 + $0x18] sm:$0xf]
    %v262 = vld [vmem:[#allocation8 + $0x1c] sm:$0xf]
    %v263 = vld [vmem:[#allocation8 + $0x20] sm:$0xf]
    %v264 = vld [vmem:[#allocation8 + $0x24] sm:$0xf]
    %v265 = vld [vmem:[#allocation8 + $0x28] sm:$0xf]
    %v266 = vld [vmem:[#allocation8 + $0x2c] sm:$0xf]
    %v267 = vld [vmem:[#allocation8 + $0x30] sm:$0xf]
    %v268 = vld [vmem:[#allocation8 + $0x34] sm:$0xf]
    %v269 = vld [vmem:[#allocation8 + $0x38] sm:$0xf]
    %v270 = vld [vmem:[#allocation8 + $0x3c] sm:$0xf]
    %v271 = vld [vmem:[%s6] sm:$0x1]
    %v273 = vperm.slane %v271, 0
    %v291 = vunpack.c.l.b16 %v255
    %v292 = vunpack.c.l.b16 %v256
    %v293 = vunpack.c.l.b16 %v257
    %v294 = vunpack.c.l.b16 %v258
    %v295 = vunpack.c.l.b16 %v259
    %v296 = vunpack.c.l.b16 %v260
    %v297 = vunpack.c.l.b16 %v261
    %v298 = vunpack.c.l.b16 %v262
    %v299 = vunpack.c.l.b16 %v263
    %v300 = vunpack.c.l.b16 %v264
    %v301 = vunpack.c.l.b16 %v265
    %v302 = vunpack.c.l.b16 %v266
    %v303 = vunpack.c.l.b16 %v267
    %v304 = vunpack.c.l.b16 %v268
    %v305 = vunpack.c.l.b16 %v269
    %v306 = vunpack.c.l.b16 %v270
    %v307 = vpack.c.b16 %v292, %v291
    %v308 = vpack.c.b16 %v294, %v293
    %v309 = vpack.c.b16 %v296, %v295
    %v310 = vpack.c.b16 %v298, %v297
    %v311 = vpack.c.b16 %v300, %v299
    %v312 = vpack.c.b16 %v302, %v301
    %v313 = vpack.c.b16 %v304, %v303
    %v314 = vpack.c.b16 %v306, %v305
    %323 = vmatpush.bf16.msra.mxu0 %v314
    %324 = vmatpush.bf16.msra.mxu0 %v313
    %325 = vmatpush.bf16.msra.mxu0 %v312
    %326 = vmatpush.bf16.msra.mxu0 %v311
    %327 = vmatpush.bf16.msra.mxu0 %v310
    %328 = vmatpush.bf16.msra.mxu0 %v309
    %329 = vmatpush.bf16.msra.mxu0 %v308
    %330 = vmatpush.bf16.msra.mxu0 %v307
    %331 = vmatmul.bf16.gmra.mxu0 %v254
    %v332 = vpop.f32.mrf.mxu0
    %v333 = vadd.f32 %v273, %v332
    %v334 = vpop.f32.mrf.mxu0
    %335 = vdwg.mxu0
    %336 = vst [vmem:[#allocation10] sm:$0xff] %v333
    // Predicated region
    $region46: #{tpu_custom_call.1} parent=1 // pred_check
      _
    $region47: #{tpu_custom_call.1} parent=1 // pred_check_branch
      %338 = sbr.rel (0) target = $region49
    $region48: #{tpu_custom_call.1} parent=1 // pred_region
      %340 = vsyncadd [#allocation4], 0
      %s342 = sshll.u32 [#allocation10], 4
      %s343 = int_to_ptr.vmem [resolvable:$true] %s342
      %s344 = sshll.u32 %s7, 4
      %s345 = int_to_ptr.hbm [resolvable:$true] %s344
      %347 = dma.vmem_to_hbm [thread:$0]  %s343, 128, %s345, [#allocation4]
    $region49: #{tpu_custom_call.1} parent=1 // pred_fallthru
      _
    // Predicated region
    $region50: #{tpu_custom_call.1} parent=1 // pred_check
      _
    $region51: #{tpu_custom_call.1} parent=1 // pred_check_branch
      %349 = sbr.rel (0) target = $region53
    $region52: #{tpu_custom_call.1} parent=1 // pred_region
      %351 = dma.done [#allocation4], 128
    $region53: #{tpu_custom_call.1} parent=1 // pred_fallthru
      _
    %352 = vsyncpa [#allocation3], 1
    %353 = vsyncpa [#allocation6], 1
    %354 = vsyncpa [#allocation9], 1
    %355 = vsyncpa [#allocation4], 1

</llo_original>
